<compile_context>
chip_gen: v6e
topology: v6e:2x2x1
jax: 0.10.0
libtpu: 0.0.40
codegen_flags: <defaults>
</compile_context>

<pallas_src>
import functools

import jax
import jax.numpy as jnp
from jax.experimental import pallas as pl
from jax.experimental.pallas import tpu as pltpu

_LANES = 128


def _pointnet_loss_kernel(n_ref, w_ref, p0_ref, p1_ref, t_ref, trans_ref,
                          out_ref, acc_ref, *, block_rows,
                          mat_diff_loss_scale):
    i = pl.program_id(0)

    @pl.when(i == 0)
    def _init():
        acc_ref[0] = 0.0   # NLL numerator  (sum of w * logp at target)
        acc_ref[1] = 0.0   # NLL denominator (sum of w)

    # ---- weighted NLL partial sums over this (block_rows, 128) tile -------
    p0 = p0_ref[...]                       # (R, 128) log-prob of class 0
    p1 = p1_ref[...]                       # (R, 128) log-prob of class 1
    t = t_ref[...]                         # (R, 128) target in {0.0, 1.0}

    w0 = w_ref[0]                          # scalar class weights from SMEM
    w1 = w_ref[1]

    # validity mask for the zero-padded tail of the flattened point list
    row = jax.lax.broadcasted_iota(jnp.int32, (block_rows, _LANES), 0)
    col = jax.lax.broadcasted_iota(jnp.int32, (block_rows, _LANES), 1)
    flat_idx = (i * block_rows + row) * _LANES + col
    valid = flat_idx < n_ref[0]

    is_one = t > 0.5
    contrib = jnp.where(is_one, w1 * p1, w0 * p0)      # w[tgt] * logp[tgt]
    den = jnp.where(is_one, w1, w0)                    # w[tgt]
    contrib = jnp.where(valid, contrib, 0.0)
    den = jnp.where(valid, den, 0.0)

    acc_ref[0] = acc_ref[0] + jnp.sum(contrib)
    acc_ref[1] = acc_ref[1] + jnp.sum(den)

    # ---- finalize: NLL + feature-transform regularizer --------------------
    @pl.when(i == pl.num_programs(0) - 1)
    def _finalize():
        nll = -acc_ref[0] / acc_ref[1]     # matches F.nll_loss(weight=...)

        trans = trans_ref[...]             # (B, d, d)
        bsz, d, _ = trans.shape
        # G[b] = trans[b] @ trans[b]^T  (batched matmul on the MXU)
        g = jnp.einsum('bij,bkj->bik', trans, trans,
                       preferred_element_type=jnp.float32)
        # ||G - I||_F^2 = sum(G^2) - 2*trace(G) + d,  trace(G) = ||trans||_F^2
        gg = jnp.sum(jnp.sum(g * g, axis=2), axis=1, keepdims=True)          # (B,1)
        tt = jnp.sum(jnp.sum(trans * trans, axis=2), axis=1, keepdims=True)  # (B,1)
        sq = gg - 2.0 * tt + jnp.float32(d)
        sq = jnp.maximum(sq, 0.0)          # guard cancellation when near-orthonormal
        norms = jnp.sqrt(sq)               # (B, 1) Frobenius norms
        mat_diff_loss = jnp.sum(norms) / jnp.float32(bsz)

        out_ref[0, 0] = nll + mat_diff_loss * jnp.float32(mat_diff_loss_scale)


def pointnet_loss_pallas(pred, trans_feat, target, class_weight,
                         mat_diff_loss_scale=0.001):
    """Equivalent of pointnet_loss.forward((pred, trans_feat), target)."""
    # glue: flatten like pred.view(-1, 2) / target.view(-1), then make the
    # NLL inputs lane-dense (rows x 128) with zero padding at the tail.
    pred2 = pred.reshape(-1, 2).astype(jnp.float32)
    tgt = target.reshape(-1).astype(jnp.float32)
    n = pred2.shape[0]

    rows = (n + _LANES - 1) // _LANES
    block_rows = min(512, ((rows + 7) // 8) * 8)           # multiple of 8 sublanes
    rows_padded = ((rows + block_rows - 1) // block_rows) * block_rows
    pad = rows_padded * _LANES - n

    def _slab(x):
        return jnp.pad(x, (0, pad)).reshape(rows_padded, _LANES)

    p0 = _slab(pred2[:, 0])
    p1 = _slab(pred2[:, 1])
    t = _slab(tgt)

    n_arr = jnp.array([n], dtype=jnp.int32)
    w = class_weight.reshape(-1).astype(jnp.float32)       # (2,)
    trans = trans_feat.astype(jnp.float32)

    grid = (rows_padded // block_rows,)

    kernel = functools.partial(_pointnet_loss_kernel,
                               block_rows=block_rows,
                               mat_diff_loss_scale=mat_diff_loss_scale)

    out = pl.pallas_call(
        kernel,
        grid=grid,
        out_shape=jax.ShapeDtypeStruct((1, 1), jnp.float32),
        in_specs=[
            pl.BlockSpec(memory_space=pltpu.MemorySpace.SMEM),        # n_valid
            pl.BlockSpec(memory_space=pltpu.MemorySpace.SMEM),        # class weights
            pl.BlockSpec((block_rows, _LANES), lambda i: (i, 0)),     # p0 tile
            pl.BlockSpec((block_rows, _LANES), lambda i: (i, 0)),     # p1 tile
            pl.BlockSpec((block_rows, _LANES), lambda i: (i, 0)),     # target tile
            pl.BlockSpec(memory_space=pltpu.MemorySpace.VMEM),        # trans_feat (whole)
        ],
        out_specs=pl.BlockSpec(memory_space=pltpu.MemorySpace.SMEM),
        scratch_shapes=[pltpu.SMEM((2,), jnp.float32)],
        compiler_params=pltpu.CompilerParams(
            dimension_semantics=("arbitrary",)),
    )(n_arr, w, p0, p1, t, trans)
    return out[0, 0]


def _reference_loss(pred, trans_feat, target, class_weight, scale=0.001):
    # pure-JAX reference for a sanity check
    pred2 = pred.reshape(-1, 2)
    tgt = target.reshape(-1)
    picked = pred2[jnp.arange(tgt.shape[0]), tgt]
    w = class_weight[tgt]
    nll = -jnp.sum(w * picked) / jnp.sum(w)
    d = trans_feat.shape[1]
    g = jnp.einsum('bij,bkj->bik', trans_feat, trans_feat)
    diff = g - jnp.eye(d)[None]
    reg = jnp.mean(jnp.sqrt(jnp.sum(diff * diff, axis=(1, 2))))
    return nll + reg * scale


if __name__ == "__main__":
    key = jax.random.PRNGKey(0)
    k1, k2, k3 = jax.random.split(key, 3)

    B, P, D = 2, 8, 32                     # batch, points-per-batch, transform dim
    # pred: log-softmax over 2 classes, shape (B, P, 2)
    logits = jax.random.normal(k1, (B, P, 2), dtype=jnp.float32)
    pred = jax.nn.log_softmax(logits, axis=-1)
    # target: int class labels in {0,1}, shape (B, P)
    target = jax.random.randint(k2, (B, P), 0, 2, dtype=jnp.int32)
    # trans_feat: (B, D, D) feature-transform matrices
    trans_feat = jax.random.normal(k3, (B, D, D), dtype=jnp.float32) * 0.1
    # class weights, like torch.tensor([1, 1])
    class_weight = jnp.array([1.0, 1.0], dtype=jnp.float32)

    total = pointnet_loss_pallas(pred, trans_feat, target, class_weight)
    total = jax.block_until_ready(total)

    ref = _reference_loss(pred, trans_feat, target, class_weight)
    assert jnp.allclose(total, ref, rtol=1e-5, atol=1e-5), (total, ref)

    print("KERNEL_OK")
</pallas_src>

<mosaic_0001>
module attributes {stable_mosaic.version = 11 : i64} {
  func.func @_pointnet_loss_kernel(%arg0: i32, %arg1: memref<1xi32, #tpu.memory_space<smem>>, %arg2: memref<2xf32, #tpu.memory_space<smem>>, %arg3: memref<8x128xf32, #tpu.memory_space<vmem>>, %arg4: memref<8x128xf32, #tpu.memory_space<vmem>>, %arg5: memref<8x128xf32, #tpu.memory_space<vmem>>, %arg6: memref<2x32x32xf32, #tpu.memory_space<vmem>>, %arg7: memref<1x1xf32, #tpu.memory_space<smem>>, %arg8: memref<2xf32, #tpu.memory_space<smem>>) attributes {dimension_semantics = [#tpu.dimension_semantics<arbitrary>], iteration_bounds = array<i64: 1>, scalar_prefetch = 0 : i64, scratch_operands = 1 : i64, tpu.core_type = #tpu.core_type<tc>, window_params = [{transform_indices = @transform_0, window_bounds = array<i64: 1>}, {transform_indices = @transform_1, window_bounds = array<i64: 2>}, {transform_indices = @transform_2, window_bounds = array<i64: 8, 128>}, {transform_indices = @transform_3, window_bounds = array<i64: 8, 128>}, {transform_indices = @transform_4, window_bounds = array<i64: 8, 128>}, {pipeline_mode = #tpu.pipeline_mode<synchronous>, transform_indices = @transform_5, window_bounds = array<i64: 2, 32, 32>}, {transform_indices = @transform_6, window_bounds = array<i64: 1, 1>}]} {
    %c0_i32 = arith.constant 0 : i32
    %0 = arith.cmpi eq, %arg0, %c0_i32 : i32
    %1 = arith.extui %0 : i1 to i32
    %c0_i32_0 = arith.constant 0 : i32
    %2 = arith.cmpi ne, %1, %c0_i32_0 : i32
    scf.if %2 {
      %cst_18 = arith.constant 0.000000e+00 : f32
      %c0_19 = arith.constant 0 : index
      %50 = memref.load %arg8[%c0_19] : memref<2xf32, #tpu.memory_space<smem>>
      memref.store %cst_18, %arg8[%c0_19] : memref<2xf32, #tpu.memory_space<smem>>
      %cst_20 = arith.constant 0.000000e+00 : f32
      %c1_21 = arith.constant 1 : index
      %51 = memref.load %arg8[%c1_21] : memref<2xf32, #tpu.memory_space<smem>>
      memref.store %cst_20, %arg8[%c1_21] : memref<2xf32, #tpu.memory_space<smem>>
    } else {
    }
    %c0 = arith.constant 0 : index
    %c0_1 = arith.constant 0 : index
    %3 = vector.load %arg3[%c0, %c0_1] : memref<8x128xf32, #tpu.memory_space<vmem>>, vector<8x128xf32>
    %c0_2 = arith.constant 0 : index
    %c0_3 = arith.constant 0 : index
    %4 = vector.load %arg4[%c0_2, %c0_3] : memref<8x128xf32, #tpu.memory_space<vmem>>, vector<8x128xf32>
    %c0_4 = arith.constant 0 : index
    %c0_5 = arith.constant 0 : index
    %5 = vector.load %arg5[%c0_4, %c0_5] : memref<8x128xf32, #tpu.memory_space<vmem>>, vector<8x128xf32>
    %c0_6 = arith.constant 0 : index
    %6 = memref.load %arg2[%c0_6] : memref<2xf32, #tpu.memory_space<smem>>
    %c1 = arith.constant 1 : index
    %7 = memref.load %arg2[%c1] : memref<2xf32, #tpu.memory_space<smem>>
    %8 = tpu.iota {dimensions = array<i32: 0>} : vector<8x128xi32>
    %9 = tpu.iota {dimensions = array<i32: 1>} : vector<8x128xi32>
    %c8_i32 = arith.constant 8 : i32
    %10 = arith.muli %arg0, %c8_i32 : i32
    %11 = vector.broadcast %10 : i32 to vector<8x128xi32>
    %12 = arith.addi %11, %8 : vector<8x128xi32>
    %c128_i32 = arith.constant 128 : i32
    %13 = vector.broadcast %c128_i32 : i32 to vector<8x128xi32>
    %14 = arith.muli %12, %13 : vector<8x128xi32>
    %15 = arith.addi %14, %9 : vector<8x128xi32>
    %c0_7 = arith.constant 0 : index
    %16 = memref.load %arg1[%c0_7] : memref<1xi32, #tpu.memory_space<smem>>
    %17 = vector.broadcast %16 : i32 to vector<8x128xi32>
    %18 = arith.cmpi slt, %15, %17 : vector<8x128xi32>
    %cst = arith.constant 5.000000e-01 : f32
    %19 = vector.broadcast %cst : f32 to vector<8x128xf32>
    %20 = arith.cmpf ogt, %5, %19 : vector<8x128xf32>
    %21 = vector.broadcast %7 : f32 to vector<8x128xf32>
    %22 = arith.mulf %21, %4 : vector<8x128xf32>
    %23 = vector.broadcast %6 : f32 to vector<8x128xf32>
    %24 = arith.mulf %23, %3 : vector<8x128xf32>
    %25 = arith.select %20, %22, %24 : vector<8x128xi1>, vector<8x128xf32>
    %26 = vector.broadcast %7 : f32 to vector<8x128xf32>
    %27 = vector.broadcast %6 : f32 to vector<8x128xf32>
    %28 = arith.select %20, %26, %27 : vector<8x128xi1>, vector<8x128xf32>
    %cst_8 = arith.constant 0.000000e+00 : f32
    %29 = vector.broadcast %cst_8 : f32 to vector<8x128xf32>
    %30 = arith.select %18, %25, %29 : vector<8x128xi1>, vector<8x128xf32>
    %cst_9 = arith.constant 0.000000e+00 : f32
    %31 = vector.broadcast %cst_9 : f32 to vector<8x128xf32>
    %32 = arith.select %18, %28, %31 : vector<8x128xi1>, vector<8x128xf32>
    %c0_10 = arith.constant 0 : index
    %33 = memref.load %arg8[%c0_10] : memref<2xf32, #tpu.memory_space<smem>>
    %34 = vector.shape_cast %30 : vector<8x128xf32> to vector<1x8x128xf32>
    %cst_11 = arith.constant dense<0.000000e+00> : vector<1xf32>
    %35 = vector.multi_reduction <add>, %34, %cst_11 [1, 2] : vector<1x8x128xf32> to vector<1xf32>
    %36 = vector.shape_cast %35 : vector<1xf32> to vector<1x1x1xf32>
    %37 = vector.extract %36[0, 0, 0] : f32 from vector<1x1x1xf32>
    %38 = arith.addf %33, %37 : f32
    %c0_12 = arith.constant 0 : index
    %39 = memref.load %arg8[%c0_12] : memref<2xf32, #tpu.memory_space<smem>>
    memref.store %38, %arg8[%c0_12] : memref<2xf32, #tpu.memory_space<smem>>
    %c1_13 = arith.constant 1 : index
    %40 = memref.load %arg8[%c1_13] : memref<2xf32, #tpu.memory_space<smem>>
    %41 = vector.shape_cast %32 : vector<8x128xf32> to vector<1x8x128xf32>
    %cst_14 = arith.constant dense<0.000000e+00> : vector<1xf32>
    %42 = vector.multi_reduction <add>, %41, %cst_14 [1, 2] : vector<1x8x128xf32> to vector<1xf32>
    %43 = vector.shape_cast %42 : vector<1xf32> to vector<1x1x1xf32>
    %44 = vector.extract %43[0, 0, 0] : f32 from vector<1x1x1xf32>
    %45 = arith.addf %40, %44 : f32
    %c1_15 = arith.constant 1 : index
    %46 = memref.load %arg8[%c1_15] : memref<2xf32, #tpu.memory_space<smem>>
    memref.store %45, %arg8[%c1_15] : memref<2xf32, #tpu.memory_space<smem>>
    %c0_i32_16 = arith.constant 0 : i32
    %47 = arith.cmpi eq, %arg0, %c0_i32_16 : i32
    %48 = arith.extui %47 : i1 to i32
    %c0_i32_17 = arith.constant 0 : i32
    %49 = arith.cmpi ne, %48, %c0_i32_17 : i32
    scf.if %49 {
      %c0_18 = arith.constant 0 : index
      %50 = memref.load %arg8[%c0_18] : memref<2xf32, #tpu.memory_space<smem>>
      %cst_19 = arith.constant 0.000000e+00 : f32
      %51 = arith.subf %cst_19, %50 : f32
      %c1_20 = arith.constant 1 : index
      %52 = memref.load %arg8[%c1_20] : memref<2xf32, #tpu.memory_space<smem>>
      %53 = arith.divf %51, %52 : f32
      %c0_21 = arith.constant 0 : index
      %c0_22 = arith.constant 0 : index
      %c0_23 = arith.constant 0 : index
      %54 = vector.load %arg6[%c0_21, %c0_22, %c0_23] : memref<2x32x32xf32, #tpu.memory_space<vmem>>, vector<2x32x32xf32>
      "tpu.trace_start"() <{level = 10 : i32, message = "bij,bkj->bik"}> : () -> ()
      %cst_24 = arith.constant dense<0.000000e+00> : vector<2x32x32xf32>
      %55 = tpu.matmul %54, %54, %cst_24 {dimension_numbers = #tpu.dot_dimension_numbers<[2], [2], [1], [1], [0, 0, 0, 1, 1, 1], [0], [0]>} : vector<2x32x32xf32>, vector<2x32x32xf32>, vector<2x32x32xf32> -> vector<2x32x32xf32>
      "tpu.trace_stop"() : () -> ()
      %56 = arith.mulf %55, %55 : vector<2x32x32xf32>
      %cst_25 = arith.constant dense<0.000000e+00> : vector<2x32xf32>
      %57 = vector.multi_reduction <add>, %56, %cst_25 [2] : vector<2x32x32xf32> to vector<2x32xf32>
      %cst_26 = arith.constant dense<0.000000e+00> : vector<2xf32>
      %58 = vector.multi_reduction <add>, %57, %cst_26 [1] : vector<2x32xf32> to vector<2xf32>
      %59 = vector.shape_cast %58 : vector<2xf32> to vector<2x1xf32>
      %60 = arith.mulf %54, %54 : vector<2x32x32xf32>
      %cst_27 = arith.constant dense<0.000000e+00> : vector<2x32xf32>
      %61 = vector.multi_reduction <add>, %60, %cst_27 [2] : vector<2x32x32xf32> to vector<2x32xf32>
      %cst_28 = arith.constant dense<0.000000e+00> : vector<2xf32>
      %62 = vector.multi_reduction <add>, %61, %cst_28 [1] : vector<2x32xf32> to vector<2xf32>
      %63 = vector.shape_cast %62 : vector<2xf32> to vector<2x1xf32>
      %cst_29 = arith.constant 2.000000e+00 : f32
      %64 = vector.broadcast %cst_29 : f32 to vector<2x1xf32>
      %65 = arith.mulf %64, %63 : vector<2x1xf32>
      %66 = arith.subf %59, %65 : vector<2x1xf32>
      %cst_30 = arith.constant 3.200000e+01 : f32
      %67 = vector.broadcast %cst_30 : f32 to vector<2x1xf32>
      %68 = arith.addf %66, %67 : vector<2x1xf32>
      %cst_31 = arith.constant 0.000000e+00 : f32
      %69 = vector.broadcast %cst_31 : f32 to vector<2x1xf32>
      %70 = arith.maximumf %68, %69 : vector<2x1xf32>
      %71 = math.sqrt %70 : vector<2x1xf32>
      %72 = vector.shape_cast %71 : vector<2x1xf32> to vector<1x2x1xf32>
      %cst_32 = arith.constant dense<0.000000e+00> : vector<1xf32>
      %73 = vector.multi_reduction <add>, %72, %cst_32 [1, 2] : vector<1x2x1xf32> to vector<1xf32>
      %74 = vector.shape_cast %73 : vector<1xf32> to vector<1x1x1xf32>
      %75 = vector.extract %74[0, 0, 0] : f32 from vector<1x1x1xf32>
      %cst_33 = arith.constant 2.000000e+00 : f32
      %76 = arith.divf %75, %cst_33 : f32
      %cst_34 = arith.constant 1.000000e-03 : f32
      %77 = arith.mulf %76, %cst_34 : f32
      %78 = arith.addf %53, %77 : f32
      %c0_35 = arith.constant 0 : index
      %c0_36 = arith.constant 0 : index
      %79 = memref.load %arg7[%c0_35, %c0_36] : memref<1x1xf32, #tpu.memory_space<smem>>
      memref.store %78, %arg7[%c0_35, %c0_36] : memref<1x1xf32, #tpu.memory_space<smem>>
    } else {
    }
    return
  }
  func.func @transform_0(%arg0: i32) -> i32 {
    %c0_i32 = arith.constant 0 : i32
    %c0_i32_0 = arith.constant 0 : i32
    return %c0_i32 : i32
  }
  func.func @transform_1(%arg0: i32) -> i32 {
    %c0_i32 = arith.constant 0 : i32
    %c0_i32_0 = arith.constant 0 : i32
    return %c0_i32 : i32
  }
  func.func @transform_2(%arg0: i32) -> (i32, i32) {
    %c0_i32 = arith.constant 0 : i32
    %c0_i32_0 = arith.constant 0 : i32
    return %arg0, %c0_i32 : i32, i32
  }
  func.func @transform_3(%arg0: i32) -> (i32, i32) {
    %c0_i32 = arith.constant 0 : i32
    %c0_i32_0 = arith.constant 0 : i32
    return %arg0, %c0_i32 : i32, i32
  }
  func.func @transform_4(%arg0: i32) -> (i32, i32) {
    %c0_i32 = arith.constant 0 : i32
    %c0_i32_0 = arith.constant 0 : i32
    return %arg0, %c0_i32 : i32, i32
  }
  func.func @transform_5(%arg0: i32) -> (i32, i32, i32) {
    %c0_i32 = arith.constant 0 : i32
    %c0_i32_0 = arith.constant 0 : i32
    %c0_i32_1 = arith.constant 0 : i32
    %c0_i32_2 = arith.constant 0 : i32
    return %c0_i32, %c0_i32_0, %c0_i32_1 : i32, i32, i32
  }
  func.func @transform_6(%arg0: i32) -> (i32, i32) {
    %c0_i32 = arith.constant 0 : i32
    %c0_i32_0 = arith.constant 0 : i32
    %c0_i32_1 = arith.constant 0 : i32
    return %c0_i32, %c0_i32_0 : i32, i32
  }
}

</mosaic_0001>

<llo_original>
// kernel: tpu_custom_call.1
$region0: #{tpu_custom_call.1}
  #allocation0 [shape = 'u32[]', space=smem, size = 0x4, offset = 0x4, fixed_abs, tag = 'smem constant byte address 0x4 - core index']
  #allocation1 [shape = 'u32[144,128]{1,0:T(1,128)}', space=vmem, size = 0x12000, scoped, tag = 'internal scratch']
  #allocation2 [shape = 'f32[2]{0:T(128)}', space=smem, size = 0x200, scoped, tag = 'scratch operand']
  #allocation3 [shape = 's32[1]{0:T(128)S(6)}', space=smem, size = 0x200, scoped, tag = 'scoped memory for tpu_custom_call.1']
  %s0 = inlined_call_operand.<no memory space> [shape: s32[1], index: 0, kind: input, shape index: {}]
  %s1 = inlined_call_operand.vmem [shape: f32[2], index: 1, kind: input, shape index: {}]
  %s2 = inlined_call_operand.hbm [shape: f32[8,128], index: 2, kind: input, shape index: {}]
  %s3 = inlined_call_operand.hbm [shape: f32[8,128], index: 3, kind: input, shape index: {}]
  %s4 = inlined_call_operand.hbm [shape: f32[8,128], index: 4, kind: input, shape index: {}]
  %s5 = inlined_call_operand.hbm [shape: f32[2,32,32], index: 5, kind: input, shape index: {}]
  %s6 = inlined_call_operand.hbm [shape: f32[1,1], index: 6, kind: output, shape index: {}]
  %s7 = sld [smem:[#allocation0]]
  $region62: #{tpu_custom_call.1} parent=0
    _
  %s9 = ssub.s32 1, %s7
  %s10 = scalar_select 0, %s9, %s7
  %11 = sst [smem:[#allocation3]] %s0
  $region1: #{tpu_custom_call.1} parent=0
    #allocation4 [shape = 'u8[512]{0}', space=smem, size = 0x200, scoped, tag = 'input window, operand 1, single buffered']
    #allocation5 [shape = 's32[1]{0}', space=sflag, size = 0x4, scoped, tag = 'scoped memory for tpu_custom_call.1']
    #allocation6 [shape = 's32[1]{0}', space=sflag, size = 0x4, scoped, tag = 'scoped memory for tpu_custom_call.1']
    #allocation7 [shape = 's32[1]{0}', space=sflag, size = 0x4, scoped, tag = 'scoped memory for tpu_custom_call.1']
    #allocation8 [shape = 'u8[4096]{0}', space=vmem, size = 0x1000, scoped, tag = 'input window, operand 2, single buffered']
    #allocation9 [shape = 'u8[4096]{0}', space=vmem, size = 0x1000, scoped, tag = 'input window, operand 3, single buffered']
    #allocation10 [shape = 's32[1]{0}', space=sflag, size = 0x4, scoped, tag = 'scoped memory for tpu_custom_call.1']
    #allocation11 [shape = 'u8[4096]{0}', space=vmem, size = 0x1000, scoped, tag = 'input window, operand 4, single buffered']
    #allocation12 [shape = 'u8[32768]{0}', space=vmem, size = 0x8000, scoped, tag = 'input window, operand 5, single buffered']
    #allocation13 [shape = 's32[1]{0}', space=sflag, size = 0x4, scoped, tag = 'scoped memory for tpu_custom_call.1']
    #allocation14 [shape = 'u8[512]{0}', space=smem, size = 0x200, scoped, tag = 'output window, operand 0, single buffered']
    %12 = vsyncpa [#allocation7], 0
    %13 = vsyncpa [#allocation5], 0
    %14 = vsyncpa [#allocation10], 0
    %15 = vsyncpa [#allocation13], 0
    %16 = vsyncpa [#allocation6], 0
    // Predicated region
    $region2: #{tpu_custom_call.1} parent=1 // pred_check
      _
    $region3: #{tpu_custom_call.1} parent=1 // pred_check_branch
      %18 = sbr.rel (0) target = $region5
    $region4: #{tpu_custom_call.1} parent=1 // pred_region
      _
    $region5: #{tpu_custom_call.1} parent=1 // pred_fallthru
      _
    // Predicated region
    $region6: #{tpu_custom_call.1} parent=1 // pred_check
      _
    $region7: #{tpu_custom_call.1} parent=1 // pred_check_branch
      %20 = sbr.rel (0) target = $region9
    $region8: #{tpu_custom_call.1} parent=1 // pred_region
      %s22 = ssub.s32 16, 16
      %23 = vsyncadd [#allocation7], %s22
      %s25 = sshll.u32 %s1, 4
      %s26 = int_to_ptr.vmem [resolvable:$true] %s25
      %28 = dma.vmem_to_smem %s26, 16, [#allocation4], [#allocation7]
    $region9: #{tpu_custom_call.1} parent=1 // pred_fallthru
      _
    // Predicated region
    $region10: #{tpu_custom_call.1} parent=1 // pred_check
      _
    $region11: #{tpu_custom_call.1} parent=1 // pred_check_branch
      %30 = sbr.rel (0) target = $region13
    $region12: #{tpu_custom_call.1} parent=1 // pred_region
      %s32 = ssub.s32 128, 128
      %33 = vsyncadd [#allocation5], %s32
      %s35 = sshll.u32 [#allocation8], 4
      %s36 = int_to_ptr.vmem [resolvable:$true] %s35
      %38 = dma.hbm_to_vmem [thread:$0]  %s2, 128, %s36, [#allocation5]
    $region13: #{tpu_custom_call.1} parent=1 // pred_fallthru
      _
    // Predicated region
    $region14: #{tpu_custom_call.1} parent=1 // pred_check
      _
    $region15: #{tpu_custom_call.1} parent=1 // pred_check_branch
      %40 = sbr.rel (0) target = $region17
    $region16: #{tpu_custom_call.1} parent=1 // pred_region
      %s42 = ssub.s32 128, 128
      %43 = vsyncadd [#allocation10], %s42
      %s45 = sshll.u32 [#allocation9], 4
      %s46 = int_to_ptr.vmem [resolvable:$true] %s45
      %48 = dma.hbm_to_vmem [thread:$0]  %s3, 128, %s46, [#allocation10]
    $region17: #{tpu_custom_call.1} parent=1 // pred_fallthru
      _
    // Predicated region
    $region18: #{tpu_custom_call.1} parent=1 // pred_check
      _
    $region19: #{tpu_custom_call.1} parent=1 // pred_check_branch
      %50 = sbr.rel (0) target = $region21
    $region20: #{tpu_custom_call.1} parent=1 // pred_region
      %s52 = ssub.s32 128, 128
      %53 = vsyncadd [#allocation10], %s52
      %s55 = sshll.u32 [#allocation11], 4
      %s56 = int_to_ptr.vmem [resolvable:$true] %s55
      %58 = dma.hbm_to_vmem [thread:$0]  %s4, 128, %s56, [#allocation10]
    $region21: #{tpu_custom_call.1} parent=1 // pred_fallthru
      _
    // Predicated region
    $region22: #{tpu_custom_call.1} parent=1 // pred_check
      _
    $region23: #{tpu_custom_call.1} parent=1 // pred_check_branch
      %60 = sbr.rel (0) target = $region25
    $region24: #{tpu_custom_call.1} parent=1 // pred_region
      %s62 = ssub.s32 1024, 1024
      %63 = vsyncadd [#allocation13], %s62
      %s64 = sshll.u32 [#allocation12], 4
      %s65 = int_to_ptr.vmem [resolvable:$true] %s64
      %70 = dma.hbm_to_vmem [thread:$0]  %s5, 1024, %s65, [#allocation13], 128, 128, 8
    $region25: #{tpu_custom_call.1} parent=1 // pred_fallthru
      _
    // Predicated region
    $region26: #{tpu_custom_call.1} parent=1 // pred_check
      _
    $region27: #{tpu_custom_call.1} parent=1 // pred_check_branch
      %72 = sbr.rel (0) target = $region29
    $region28: #{tpu_custom_call.1} parent=1 // pred_region
      %73 = dma.done [#allocation7], 16
    $region29: #{tpu_custom_call.1} parent=1 // pred_fallthru
      _
    // Predicated region
    $region30: #{tpu_custom_call.1} parent=1 // pred_check
      _
    $region31: #{tpu_custom_call.1} parent=1 // pred_check_branch
      %75 = sbr.rel (0) target = $region33
    $region32: #{tpu_custom_call.1} parent=1 // pred_region
      %76 = dma.done [#allocation5], 128
    $region33: #{tpu_custom_call.1} parent=1 // pred_fallthru
      _
    // Predicated region
    $region34: #{tpu_custom_call.1} parent=1 // pred_check
      _
    $region35: #{tpu_custom_call.1} parent=1 // pred_check_branch
      %78 = sbr.rel (0) target = $region37
    $region36: #{tpu_custom_call.1} parent=1 // pred_region
      %79 = dma.done [#allocation10], 128
    $region37: #{tpu_custom_call.1} parent=1 // pred_fallthru
      _
    // Predicated region
    $region38: #{tpu_custom_call.1} parent=1 // pred_check
      _
    $region39: #{tpu_custom_call.1} parent=1 // pred_check_branch
      %81 = sbr.rel (0) target = $region41
    $region40: #{tpu_custom_call.1} parent=1 // pred_region
      %82 = dma.done [#allocation10], 128
    $region41: #{tpu_custom_call.1} parent=1 // pred_fallthru
      _
    // Predicated region
    $region42: #{tpu_custom_call.1} parent=1 // pred_check
      _
    $region43: #{tpu_custom_call.1} parent=1 // pred_check_branch
      %84 = sbr.rel (0) target = $region45
    $region44: #{tpu_custom_call.1} parent=1 // pred_region
      %85 = dma.done [#allocation13], 1024
    $region45: #{tpu_custom_call.1} parent=1 // pred_fallthru
      _
    %86 = sfence
    %p87 = scmp.eq.s32.totalorder 0, 0
    // Predicated region
    $region46: #{tpu_custom_call.1} parent=1 // pred_check
      %p88 = pneg %p87
    $region47: #{tpu_custom_call.1} parent=1 // pred_check_branch
      %90 = sbr.rel (%p88) target = $region49
    $region48: #{tpu_custom_call.1} parent=1 // pred_region
      %s91 = scalar_lea.smem [#allocation2], 0
      %92 = sst [smem:[%s91]] 0.0
      %s93 = scalar_lea.smem [#allocation2], 1
      %94 = sst [smem:[%s93]] 0.0
    $region49: #{tpu_custom_call.1} parent=1 // pred_fallthru
      _
    %v95 = vld [vmem:[#allocation8] sm:$0xff]
    %v96 = vld [vmem:[#allocation9] sm:$0xff]
    %v97 = vld [vmem:[#allocation11] sm:$0xff]
    %s98 = sld [smem:[#allocation4]]
    %s99 = sld [smem:[#allocation4 + $0x1]]
    %v100 = vlaneseq
    %v101 = vshrl.u32 %v100, 7
    %v102 = vlaneseq
    %v103 = vand.u32 %v102, 127
    %s104 = smul.u32 0, 8
    %v105 = vstv %s104
    %v106 = vadd.s32 %v105, %v101
    %v107 = vmul.u32 %v106, 128
    %v108 = vadd.s32 %v107, %v103
    %s109 = sld [smem:[#allocation3]]
    %v110 = vstv %s109
    %vm111 = vcmp.lt.s32.totalorder %v108, %v110
    %vm112 = vcmp.gt.f32.partialorder %v97, 0.5
    %v113 = vstv %s99
    %v114 = vmul.f32 %v113, %v96
    %v115 = vstv %s98
    %v116 = vmul.f32 %v115, %v95
    %v117 = vsel %vm112, %v114, %v116
    %v118 = vsel %vm112, %v113, %v115
    %v119 = vsel %vm111, %v117, 0.0
    %v120 = vsel %vm111, %v118, 0.0
    %s121 = sld [smem:[#allocation2]]
    %122 = vadd.xlane.f32.xlu0 %v119
    %v123 = vpop.xlane.xlu0 %122
    %v124 = vrot.slane %v123, 4
    %v125 = vadd.f32 %v123, %v124
    %v126 = vrot.slane %v125, 2
    %v127 = vadd.f32 %v125, %v126
    %v128 = vrot.slane %v127, 1
    %v129 = vadd.f32 %v127, %v128
    %s130 = vtos %v129
    %s131 = sadd.f32 %s121, %s130
    %s132 = scalar_lea.smem [#allocation2], 0
    %133 = sst [smem:[%s132]] %s131
    %s134 = sld [smem:[#allocation2 + $0x1]]
    %135 = vadd.xlane.f32.xlu0 %v120
    %v136 = vpop.xlane.xlu0 %135
    %v137 = vrot.slane %v136, 4
    %v138 = vadd.f32 %v136, %v137
    %v139 = vrot.slane %v138, 2
    %v140 = vadd.f32 %v138, %v139
    %v141 = vrot.slane %v140, 1
    %v142 = vadd.f32 %v140, %v141
    %s143 = vtos %v142
    %s144 = sadd.f32 %s134, %s143
    %s145 = scalar_lea.smem [#allocation2], 1
    %146 = sst [smem:[%s145]] %s144
    // Predicated region
    $region50: #{tpu_custom_call.1} parent=1 // pred_check
      %p147 = pneg %p87
    $region51: #{tpu_custom_call.1} parent=1 // pred_check_branch
      %149 = sbr.rel (%p147) target = $region53
    $region52: #{tpu_custom_call.1} parent=1 // pred_region
      %s150 = sld [smem:[#allocation2]]
      %s151 = ssub.f32 0.0, %s150
      %s152 = sld [smem:[#allocation2 + $0x1]]
      %v153 = vstv %s152
      %v154 = vrcp.pop %v153
      %s155 = vtos %v154
      %s156 = smul.f32 %s151, %s155
      %v157 = vld [vmem:[#allocation12] sm:$0xff]
      %v158 = vld [vmem:[#allocation12 + $0x8] sm:$0xff]
      %v159 = vld [vmem:[#allocation12 + $0x10] sm:$0xff]
      %v160 = vld [vmem:[#allocation12 + $0x18] sm:$0xff]
      %v161 = vld [vmem:[#allocation12 + $0x20] sm:$0xff]
      %v162 = vld [vmem:[#allocation12 + $0x28] sm:$0xff]
      %v163 = vld [vmem:[#allocation12 + $0x30] sm:$0xff]
      %v164 = vld [vmem:[#allocation12 + $0x38] sm:$0xff]
      %vm165 = vcmask 261120
      %v167 = vsel %vm165, %v157, 0
      %v170 = vsel %vm165, %v158, 0
      %v173 = vsel %vm165, %v159, 0
      %v176 = vsel %vm165, %v160, 0
      %178 = vmatprep.subr.mxu0 0.0
      %179 = vmatpush1.xpose.msra.mxu0 0.0
      %180 = vmatprep.subr.mxu0 0.0
      %181 = vmatpush1.xpose.msra.mxu0 0.0
      %182 = vmatprep.subr.mxu0 0.0
      %183 = vmatpush1.xpose.msra.mxu0 0.0
      %184 = vmatprep.subr.mxu0 0.0
      %185 = vmatpush1.xpose.msra.mxu0 0.0
      %186 = vmatprep.subr.mxu0 0.0
      %187 = vmatpush1.xpose.msra.mxu0 0.0
      %188 = vmatprep.subr.mxu0 0.0
      %189 = vmatpush1.xpose.msra.mxu0 0.0
      %190 = vmatprep.subr.mxu0 0.0
      %191 = vmatpush1.xpose.msra.mxu0 0.0
      %192 = vmatprep.subr.mxu0 0.0
      %193 = vmatpush1.xpose.msra.mxu0 0.0
      %194 = vmatprep.subr.mxu0 0.0
      %195 = vmatpush1.xpose.msra.mxu0 0.0
      %196 = vmatprep.subr.mxu0 0.0
      %197 = vmatpush1.xpose.msra.mxu0 0.0
      %198 = vmatprep.subr.mxu0 0.0
      %199 = vmatpush1.xpose.msra.mxu0 0.0
      %200 = vmatprep.subr.mxu0 0.0
      %201 = vmatpush1.xpose.msra.mxu0 0.0
      %202 = vmatprep.subr.mxu0 0.0
      %203 = vmatpush1.xpose.msra.mxu0 %v176
      %204 = vmatprep.subr.mxu0 0.0
      %205 = vmatpush1.xpose.msra.mxu0 %v173
      %206 = vmatprep.subr.mxu0 0.0
      %207 = vmatpush1.xpose.msra.mxu0 %v170
      %208 = vmatprep.subr.mxu0 0.0
      %209 = vmatpush1.xpose.msra.mxu0 %v167
      %210 = vmatprep.subr.mxu0 0.0
      %211 = vmatpush2.xpose.msra.mxu0 0.0
      %212 = vmatprep.subr.mxu0 0.0
      %213 = vmatpush2.xpose.msra.mxu0 0.0
      %214 = vmatprep.subr.mxu0 0.0
      %215 = vmatpush2.xpose.msra.mxu0 0.0
      %216 = vmatprep.subr.mxu0 0.0
      %217 = vmatpush2.xpose.msra.mxu0 0.0
      %218 = vmatprep.subr.mxu0 0.0
      %219 = vmatpush2.xpose.msra.mxu0 0.0
      %220 = vmatprep.subr.mxu0 0.0
      %221 = vmatpush2.xpose.msra.mxu0 0.0
      %222 = vmatprep.subr.mxu0 0.0
      %223 = vmatpush2.xpose.msra.mxu0 0.0
      %224 = vmatprep.subr.mxu0 0.0
      %225 = vmatpush2.xpose.msra.mxu0 0.0
      %226 = vmatprep.subr.mxu0 0.0
      %227 = vmatpush2.xpose.msra.mxu0 0.0
      %228 = vmatprep.subr.mxu0 0.0
      %229 = vmatpush2.xpose.msra.mxu0 0.0
      %230 = vmatprep.subr.mxu0 0.0
      %231 = vmatpush2.xpose.msra.mxu0 0.0
      %232 = vmatprep.subr.mxu0 0.0
      %233 = vmatpush2.xpose.msra.mxu0 0.0
      %234 = vmatprep.subr.mxu0 0.0
      %235 = vmatpush2.xpose.msra.mxu0 0.0
      %236 = vmatprep.subr.mxu0 0.0
      %237 = vmatpush2.xpose.msra.mxu0 0.0
      %238 = vmatprep.subr.mxu0 0.0
      %239 = vmatpush2.xpose.msra.mxu0 0.0
      %240 = vmatprep.subr.mxu0 0.0
      %241 = vmatpush2.xpose.msra.mxu0 0.0
      %242 = vmatprep.mubr.f32.mxu0 0.0
      %243 = vmatmul.mubr.f32.gmra.mxu0 %v167
      %v244 = vpop.f32.mrf.mxu0
      %v245 = vadd.f32 0.0, %v244
      %v246 = vpop.f32.mrf.mxu0
      %247 = vmatprep.mubr.f32.mxu0 0.0
      %248 = vmatmul.mubr.f32.gmra.mxu0 %v170
      %v249 = vpop.f32.mrf.mxu0
      %v250 = vadd.f32 0.0, %v249
      %v251 = vpop.f32.mrf.mxu0
      %252 = vmatprep.mubr.f32.mxu0 0.0
      %253 = vmatmul.mubr.f32.gmra.mxu0 %v173
      %v254 = vpop.f32.mrf.mxu0
      %v255 = vadd.f32 0.0, %v254
      %v256 = vpop.f32.mrf.mxu0
      %257 = vmatprep.mubr.f32.mxu0 0.0
      %258 = vmatmul.mubr.f32.gmra.mxu0 %v176
      %v259 = vpop.f32.mrf.mxu0
      %v260 = vadd.f32 0.0, %v259
      %v261 = vpop.f32.mrf.mxu0
      %262 = vdwg.mxu0
      %v264 = vsel %vm165, %v161, 0
      %v267 = vsel %vm165, %v162, 0
      %v270 = vsel %vm165, %v163, 0
      %v273 = vsel %vm165, %v164, 0
      %275 = vmatprep.subr.mxu0 0.0
      %276 = vmatpush1.xpose.msra.mxu0 0.0
      %277 = vmatprep.subr.mxu0 0.0
      %278 = vmatpush1.xpose.msra.mxu0 0.0
      %279 = vmatprep.subr.mxu0 0.0
      %280 = vmatpush1.xpose.msra.mxu0 0.0
      %281 = vmatprep.subr.mxu0 0.0
      %282 = vmatpush1.xpose.msra.mxu0 0.0
      %283 = vmatprep.subr.mxu0 0.0
      %284 = vmatpush1.xpose.msra.mxu0 0.0
      %285 = vmatprep.subr.mxu0 0.0
      %286 = vmatpush1.xpose.msra.mxu0 0.0
      %287 = vmatprep.subr.mxu0 0.0
      %288 = vmatpush1.xpose.msra.mxu0 0.0
      %289 = vmatprep.subr.mxu0 0.0
      %290 = vmatpush1.xpose.msra.mxu0 0.0
      %291 = vmatprep.subr.mxu0 0.0
      %292 = vmatpush1.xpose.msra.mxu0 0.0
      %293 = vmatprep.subr.mxu0 0.0
      %294 = vmatpush1.xpose.msra.mxu0 0.0
      %295 = vmatprep.subr.mxu0 0.0
      %296 = vmatpush1.xpose.msra.mxu0 0.0
      %297 = vmatprep.subr.mxu0 0.0
      %298 = vmatpush1.xpose.msra.mxu0 0.0
      %299 = vmatprep.subr.mxu0 0.0
      %300 = vmatpush1.xpose.msra.mxu0 %v273
      %301 = vmatprep.subr.mxu0 0.0
      %302 = vmatpush1.xpose.msra.mxu0 %v270
      %303 = vmatprep.subr.mxu0 0.0
      %304 = vmatpush1.xpose.msra.mxu0 %v267
      %305 = vmatprep.subr.mxu0 0.0
      %306 = vmatpush1.xpose.msra.mxu0 %v264
      %307 = vmatprep.subr.mxu0 0.0
      %308 = vmatpush2.xpose.msra.mxu0 0.0
      %309 = vmatprep.subr.mxu0 0.0
      %310 = vmatpush2.xpose.msra.mxu0 0.0
      %311 = vmatprep.subr.mxu0 0.0
      %312 = vmatpush2.xpose.msra.mxu0 0.0
      %313 = vmatprep.subr.mxu0 0.0
      %314 = vmatpush2.xpose.msra.mxu0 0.0
      %315 = vmatprep.subr.mxu0 0.0
      %316 = vmatpush2.xpose.msra.mxu0 0.0
      %317 = vmatprep.subr.mxu0 0.0
      %318 = vmatpush2.xpose.msra.mxu0 0.0
      %319 = vmatprep.subr.mxu0 0.0
      %320 = vmatpush2.xpose.msra.mxu0 0.0
      %321 = vmatprep.subr.mxu0 0.0
      %322 = vmatpush2.xpose.msra.mxu0 0.0
      %323 = vmatprep.subr.mxu0 0.0
      %324 = vmatpush2.xpose.msra.mxu0 0.0
      %325 = vmatprep.subr.mxu0 0.0
      %326 = vmatpush2.xpose.msra.mxu0 0.0
      %327 = vmatprep.subr.mxu0 0.0
      %328 = vmatpush2.xpose.msra.mxu0 0.0
      %329 = vmatprep.subr.mxu0 0.0
      %330 = vmatpush2.xpose.msra.mxu0 0.0
      %331 = vmatprep.subr.mxu0 0.0
      %332 = vmatpush2.xpose.msra.mxu0 0.0
      %333 = vmatprep.subr.mxu0 0.0
      %334 = vmatpush2.xpose.msra.mxu0 0.0
      %335 = vmatprep.subr.mxu0 0.0
      %336 = vmatpush2.xpose.msra.mxu0 0.0
      %337 = vmatprep.subr.mxu0 0.0
      %338 = vmatpush2.xpose.msra.mxu0 0.0
      %339 = vmatprep.mubr.f32.mxu0 0.0
      %340 = vmatmul.mubr.f32.gmra.mxu0 %v264
      %v341 = vpop.f32.mrf.mxu0
      %v342 = vadd.f32 0.0, %v341
      %v343 = vpop.f32.mrf.mxu0
      %344 = vmatprep.mubr.f32.mxu0 0.0
      %345 = vmatmul.mubr.f32.gmra.mxu0 %v267
      %v346 = vpop.f32.mrf.mxu0
      %v347 = vadd.f32 0.0, %v346
      %v348 = vpop.f32.mrf.mxu0
      %349 = vmatprep.mubr.f32.mxu0 0.0
      %350 = vmatmul.mubr.f32.gmra.mxu0 %v270
      %v351 = vpop.f32.mrf.mxu0
      %v352 = vadd.f32 0.0, %v351
      %v353 = vpop.f32.mrf.mxu0
      %354 = vmatprep.mubr.f32.mxu0 0.0
      %355 = vmatmul.mubr.f32.gmra.mxu0 %v273
      %v356 = vpop.f32.mrf.mxu0
      %v357 = vadd.f32 0.0, %v356
      %v358 = vpop.f32.mrf.mxu0
      %359 = vdwg.mxu0
      %v360 = vmul.f32 %v245, %v245
      %v361 = vmul.f32 %v250, %v250
      %v362 = vmul.f32 %v255, %v255
      %v363 = vmul.f32 %v260, %v260
      %v364 = vmul.f32 %v342, %v342
      %v365 = vmul.f32 %v347, %v347
      %v366 = vmul.f32 %v352, %v352
      %v367 = vmul.f32 %v357, %v357
      %v368 = vsel %vm165, %v360, 0.0
      %369 = vadd.xlane.f32.xlu0 %v368
      %v370 = vpop.xlane.xlu0 %369
      %v371 = vsel %vm165, %v361, 0.0
      %372 = vadd.xlane.f32.xlu0 %v371
      %v373 = vpop.xlane.xlu0 %372
      %v374 = vsel %vm165, %v362, 0.0
      %375 = vadd.xlane.f32.xlu0 %v374
      %v376 = vpop.xlane.xlu0 %375
      %v377 = vsel %vm165, %v363, 0.0
      %378 = vadd.xlane.f32.xlu0 %v377
      %v379 = vpop.xlane.xlu0 %378
      %v380 = vsel %vm165, %v364, 0.0
      %381 = vadd.xlane.f32.xlu0 %v380
      %v382 = vpop.xlane.xlu0 %381
      %v383 = vsel %vm165, %v365, 0.0
      %384 = vadd.xlane.f32.xlu0 %v383
      %v385 = vpop.xlane.xlu0 %384
      %v386 = vsel %vm165, %v366, 0.0
      %387 = vadd.xlane.f32.xlu0 %v386
      %v388 = vpop.xlane.xlu0 %387
      %v389 = vsel %vm165, %v367, 0.0
      %390 = vadd.xlane.f32.xlu0 %v389
      %v391 = vpop.xlane.xlu0 %390
      %v400 = vlaneseq
      %v401 = vshrl.u32 %v400, 7
      %v402 = vsub.s32 %v103, %v401
      %v403 = vrot.slane %v370, %v402
      %v404 = vadd.s32 %v103, 4294967288
      %v405 = vlaneseq
      %v406 = vshrl.u32 %v405, 7
      %v407 = vsub.s32 %v404, %v406
      %v408 = vrot.slane %v373, %v407
      %vm409 = vcmask 130112
      %v410 = vsel %vm409, %v408, %v403
      %v411 = vadd.s32 %v103, 4294967280
      %v412 = vlaneseq
      %v413 = vshrl.u32 %v412, 7
      %v414 = vsub.s32 %v411, %v413
      %v415 = vrot.slane %v376, %v414
      %vm416 = vcmask 195712
      %v417 = vsel %vm416, %v415, %v410
      %v418 = vadd.s32 %v103, 4294967272
      %v419 = vlaneseq
      %v420 = vshrl.u32 %v419, 7
      %v421 = vsub.s32 %v418, %v420
      %v422 = vrot.slane %v379, %v421
      %vm423 = vcmask 261312
      %v424 = vsel %vm423, %v422, %v417
      %v425 = vlaneseq
      %v426 = vshrl.u32 %v425, 7
      %v427 = vsub.s32 %v103, %v426
      %v428 = vrot.slane %v382, %v427
      %v429 = vlaneseq
      %v430 = vshrl.u32 %v429, 7
      %v431 = vsub.s32 %v404, %v430
      %v432 = vrot.slane %v385, %v431
      %v433 = vsel %vm409, %v432, %v428
      %v434 = vlaneseq
      %v435 = vshrl.u32 %v434, 7
      %v436 = vsub.s32 %v411, %v435
      %v437 = vrot.slane %v388, %v436
      %v438 = vsel %vm416, %v437, %v433
      %v439 = vlaneseq
      %v440 = vshrl.u32 %v439, 7
      %v441 = vsub.s32 %v418, %v440
      %v442 = vrot.slane %v391, %v441
      %v443 = vsel %vm423, %v442, %v438
      %vm444 = vcmask 1041409
      %v445 = vsel %vm444, %v443, %v424
      %vm447 = vcmask 254976
      %v448 = vsel %vm447, %v445, 0.0
      %449 = vadd.xlane.f32.xlu0 %v448
      %v450 = vpop.xlane.xlu0 %449
      %v451 = vmul.f32 %v157, %v157
      %v452 = vmul.f32 %v158, %v158
      %v453 = vmul.f32 %v159, %v159
      %v454 = vmul.f32 %v160, %v160
      %v455 = vmul.f32 %v161, %v161
      %v456 = vmul.f32 %v162, %v162
      %v457 = vmul.f32 %v163, %v163
      %v458 = vmul.f32 %v164, %v164
      %v459 = vsel %vm165, %v451, 0.0
      %460 = vadd.xlane.f32.xlu0 %v459
      %v461 = vpop.xlane.xlu0 %460
      %v462 = vsel %vm165, %v452, 0.0
      %463 = vadd.xlane.f32.xlu0 %v462
      %v464 = vpop.xlane.xlu0 %463
      %v465 = vsel %vm165, %v453, 0.0
      %466 = vadd.xlane.f32.xlu0 %v465
      %v467 = vpop.xlane.xlu0 %466
      %v468 = vsel %vm165, %v454, 0.0
      %469 = vadd.xlane.f32.xlu0 %v468
      %v470 = vpop.xlane.xlu0 %469
      %v471 = vsel %vm165, %v455, 0.0
      %472 = vadd.xlane.f32.xlu0 %v471
      %v473 = vpop.xlane.xlu0 %472
      %v474 = vsel %vm165, %v456, 0.0
      %475 = vadd.xlane.f32.xlu0 %v474
      %v476 = vpop.xlane.xlu0 %475
      %v477 = vsel %vm165, %v457, 0.0
      %478 = vadd.xlane.f32.xlu0 %v477
      %v479 = vpop.xlane.xlu0 %478
      %v480 = vsel %vm165, %v458, 0.0
      %481 = vadd.xlane.f32.xlu0 %v480
      %v482 = vpop.xlane.xlu0 %481
      %v491 = vlaneseq
      %v492 = vshrl.u32 %v491, 7
      %v493 = vsub.s32 %v103, %v492
      %v494 = vrot.slane %v461, %v493
      %v495 = vlaneseq
      %v496 = vshrl.u32 %v495, 7
      %v497 = vsub.s32 %v404, %v496
      %v498 = vrot.slane %v464, %v497
      %v499 = vsel %vm409, %v498, %v494
      %v500 = vlaneseq
      %v501 = vshrl.u32 %v500, 7
      %v502 = vsub.s32 %v411, %v501
      %v503 = vrot.slane %v467, %v502
      %v504 = vsel %vm416, %v503, %v499
      %v505 = vlaneseq
      %v506 = vshrl.u32 %v505, 7
      %v507 = vsub.s32 %v418, %v506
      %v508 = vrot.slane %v470, %v507
      %v509 = vsel %vm423, %v508, %v504
      %v510 = vlaneseq
      %v511 = vshrl.u32 %v510, 7
      %v512 = vsub.s32 %v103, %v511
      %v513 = vrot.slane %v473, %v512
      %v514 = vlaneseq
      %v515 = vshrl.u32 %v514, 7
      %v516 = vsub.s32 %v404, %v515
      %v517 = vrot.slane %v476, %v516
      %v518 = vsel %vm409, %v517, %v513
      %v519 = vlaneseq
      %v520 = vshrl.u32 %v519, 7
      %v521 = vsub.s32 %v411, %v520
      %v522 = vrot.slane %v479, %v521
      %v523 = vsel %vm416, %v522, %v518
      %v524 = vlaneseq
      %v525 = vshrl.u32 %v524, 7
      %v526 = vsub.s32 %v418, %v525
      %v527 = vrot.slane %v482, %v526
      %v528 = vsel %vm423, %v527, %v523
      %v529 = vsel %vm444, %v528, %v509
      %v531 = vsel %vm447, %v529, 0.0
      %532 = vadd.xlane.f32.xlu0 %v531
      %v533 = vpop.xlane.xlu0 %532
      %v534 = vmul.f32 %v533, 2.0
      %v535 = vsub.f32 %v450, %v534
      %v536 = vadd.f32 %v535, 32.0
      %v537 = vmax.f32 %v536, 0.0
      %v538 = vrsqrt.pop %v537
      %v539 = vmul.f32 %v537, %v538
      %vm540 = vcmp.eq.f32.partialorder %v537, inf
      %v541 = vsel %vm540, %v537, %v539
      %vm542 = vcmp.eq.f32.partialorder %v537, 0.0
      %v543 = vand.u32 %v537, 2147483648
      %v544 = vsel %vm542, %v543, %v541
      %vm545 = vcmask 1024
      %v546 = vsel %vm545, %v544, 0.0
      %547 = vadd.xlane.f32.xlu0 %v546
      %v548 = vpop.xlane.xlu0 %547
      %v549 = vrot.slane %v548, 4
      %v550 = vadd.f32 %v548, %v549
      %v551 = vrot.slane %v550, 2
      %v552 = vadd.f32 %v550, %v551
      %v553 = vrot.slane %v552, 1
      %v554 = vadd.f32 %v552, %v553
      %s555 = vtos %v554
      %v556 = vrcp.pop 2.0
      %s557 = vtos %v556
      %s558 = smul.f32 %s555, %s557
      %s559 = smul.f32 %s558, 0.001
      %s560 = sadd.f32 %s156, %s559
      %s561 = scalar_lea.smem [#allocation14], 0
      %562 = sst [smem:[%s561]] %s560
    $region53: #{tpu_custom_call.1} parent=1 // pred_fallthru
      _
    // Predicated region
    $region54: #{tpu_custom_call.1} parent=1 // pred_check
      _
    $region55: #{tpu_custom_call.1} parent=1 // pred_check_branch
      %564 = sbr.rel (0) target = $region57
    $region56: #{tpu_custom_call.1} parent=1 // pred_region
      %s566 = ssub.s32 16, 16
      %567 = vsyncadd [#allocation6], %s566
      %570 = dma.smem_to_hbm [#allocation14], 16, %s6, [#allocation6]
    $region57: #{tpu_custom_call.1} parent=1 // pred_fallthru
      _
    // Predicated region
    $region58: #{tpu_custom_call.1} parent=1 // pred_check
      _
    $region59: #{tpu_custom_call.1} parent=1 // pred_check_branch
      %572 = sbr.rel (0) target = $region61
    $region60: #{tpu_custom_call.1} parent=1 // pred_region
      %573 = dma.done [#allocation6], 16
    $region61: #{tpu_custom_call.1} parent=1 // pred_fallthru
      _
    %574 = sfence
    %575 = vsyncpa [#allocation5], 1
    %576 = vsyncpa [#allocation10], 1
    %577 = vsyncpa [#allocation13], 1
    %578 = vsyncpa [#allocation6], 1
    %579 = vsyncpa [#allocation7], 1

</llo_original>
